<compile_context>
chip_gen: v5e
topology: v5e:2x2
jax: 0.10.0
libtpu: 0.0.40
codegen_flags: <defaults>
</compile_context>

<pallas_src>
import jax
import jax.numpy as jnp
from jax.experimental import pallas as pl
from jax.experimental.pallas import tpu as pltpu


def _round_up(x: int, m: int) -> int:
    return (x + m - 1) // m * m


def _choose_tm(m: int, tm_max: int) -> int:
    """Row (M) tile: multiple of 8, <= tm_max, never larger than the row count,
    preferring an even tile count so v7x's two TensorCores get a balanced split
    of the megacore-parallel M axis, while minimizing masked (wasted) rows."""
    tm_max = max(8, (tm_max // 8) * 8)
    if m <= tm_max:
        return max(8, (m // 8) * 8)            # single (or near-single) tile
    ni = -(-m // tm_max)                       # cdiv
    if ni % 2:
        ni += 1                                # even split across 2 TCs (v7x)
    tm = _round_up(-(-m // ni), 8)
    return min(max(tm, 8), tm_max)


def _proj_kernel_single_k(x_ref, w_ref, o_ref):
    """Full-K step: x[tm,K] @ W_kn[K,tn] -> o[tm,tn], f32 MXU accumulation.

    The activation is cast to the (persistently stored) weight dtype in-kernel,
    so the wrapper never makes an extra HBM cast pass over x."""
    x = x_ref[...]
    if x.dtype != w_ref.dtype:
        x = x.astype(w_ref.dtype)
    o_ref[...] = jnp.dot(
        x, w_ref[...], preferred_element_type=jnp.float32
    ).astype(o_ref.dtype)


def _proj_kernel_multi_k(x_ref, w_ref, o_ref, acc_ref):
    """K-tiled path: f32 accumulator resident across the (innermost) K axis.
    Slower than the full-K path for these shapes; kept for generality."""
    k = pl.program_id(2)

    @pl.when(k == 0)
    def _():
        acc_ref[...] = jnp.zeros_like(acc_ref)

    x = x_ref[...]
    if x.dtype != w_ref.dtype:
        x = x.astype(w_ref.dtype)
    acc_ref[...] += jnp.dot(x, w_ref[...], preferred_element_type=jnp.float32)

    @pl.when(k == pl.num_programs(2) - 1)
    def _():
        o_ref[...] = acc_ref[...].astype(o_ref.dtype)


def prepare_projector_weight(weight_nk, dtype=jnp.bfloat16):
    """One-time, amortized weight preprocessing (do this at parameter-load time).

    PyTorch nn.Linear layout [llm_dim, vision_dim] -> kernel layout
    [vision_dim, llm_dim] (K, N), optionally cast (bf16 recommended for
    v6e/v7x MXU peak; accumulation in the kernel stays f32)."""
    w = jnp.asarray(weight_nk).T
    if dtype is not None:
        w = w.astype(dtype)
    return w


def prismatic_projector_forward(
    vision_features,
    weight_kn,
    *,
    tm: int = 256,
    tn: int | None = None,
    tk: int | None = None,
    out_dtype=None,
    single_buffer_weight: bool = True,
):
    """
    Args:
      vision_features: [B, S, vision_dim]
      weight_kn:       [vision_dim, llm_dim]  (from prepare_projector_weight)
      tm:              max M (row) tile; actual tile picked by _choose_tm.
      tn, tk:          optional N / K tiles (must divide and be multiples of 128).
                       Default = full extent (weight resident in VMEM, fast path).
      out_dtype:       output dtype (default: input dtype; pass bf16 if the
                       consumer allows — halves the output HBM write on v5e).
    Returns:
      [B, S, llm_dim]
    """
    B, S, K = vision_features.shape
    Kw, N = weight_kn.shape
    assert Kw == K, (
        f"weight_kn must be [vision_dim={K}, llm_dim], got {weight_kn.shape}. "
        "Convert the PyTorch [llm_dim, vision_dim] weight once with "
        "prepare_projector_weight().")

    out_dtype = vision_features.dtype if out_dtype is None else out_dtype

    M = B * S
    x2d = vision_features.reshape(M, K)

    # Tiny-M corner case only (M < one sublane group): pad a handful of rows.
    padded = M < 8
    if padded:
        x2d = jnp.pad(x2d, ((0, 8 - M), (0, 0)))
    M_rows = max(M, 8)

    tm = _choose_tm(M_rows, tm)
    tn = N if tn is None else tn
    tk = K if tk is None else tk
    if tn != N:
        assert N % tn == 0 and tn % 128 == 0, "tn must divide N and be a multiple of 128"
    if tk != K:
        assert K % tk == 0 and tk % 128 == 0, "tk must divide K and be a multiple of 128"

    ni = pl.cdiv(M_rows, tm)   # partial last M block is masked by Pallas (no jnp.pad)
    nj = N // tn
    nk = K // tk

    x_bytes = jnp.dtype(x2d.dtype).itemsize
    w_bytes = jnp.dtype(weight_kn.dtype).itemsize
    o_bytes = jnp.dtype(out_dtype).itemsize

    if nk == 1:
        kernel = _proj_kernel_single_k
        scratch = []
    else:
        kernel = _proj_kernel_multi_k
        scratch = [pltpu.VMEM((tm, tn), jnp.float32)]

    cost = pl.CostEstimate(
        flops=2 * M * N * K,
        transcendentals=0,
        bytes_accessed=M * K * x_bytes + K * N * w_bytes + M * N * o_bytes,
    )

    # Weight block index (k, j) is constant over the whole grid when nj==nk==1:
    # single-buffer it (it is DMA'd exactly once) to save a full weight tile of VMEM.
    use_single_buf = single_buffer_weight and nj == 1 and nk == 1

    def build(weight_pipeline_mode):
        w_kwargs = {}
        w_bufs = 2
        if weight_pipeline_mode is not None:
            w_kwargs["pipeline_mode"] = weight_pipeline_mode
            w_bufs = 1

        # VMEM footprint of the actual tiles (x/out double-buffered by Pallas).
        est = (2 * tm * tk * x_bytes
               + w_bufs * tk * tn * w_bytes
               + 2 * tm * tn * o_bytes)
        if nk > 1:
            est += tm * tn * 4
        try:
            vmem_cap = pltpu.get_tpu_info().vmem_capacity_bytes
        except Exception:
            vmem_cap = 64 << 20            # v7x per-TensorCore VMEM (most restrictive)
        vmem_limit = int(min(max(est + (8 << 20), 32 << 20), int(0.75 * vmem_cap)))

        return pl.pallas_call(
            kernel,
            out_shape=jax.ShapeDtypeStruct((M_rows, N), out_dtype),
            grid_spec=pltpu.PrefetchScalarGridSpec(
                num_scalar_prefetch=0,
                # N tiles outermost, M tiles next, reduction (K) innermost; with the
                # default full-K/full-N tiles the weight tile is DMA'd exactly once.
                grid=(nj, ni, nk),
                in_specs=[
                    pl.BlockSpec((tm, tk), lambda j, i, k: (i, k)),          # x  [M, K]
                    pl.BlockSpec((tk, tn), lambda j, i, k: (k, j), **w_kwargs),  # W_kn [K, N]
                ],
                out_specs=pl.BlockSpec((tm, tn), lambda j, i, k: (i, j)),
                scratch_shapes=scratch,
            ),
            compiler_params=pltpu.CompilerParams(
                dimension_semantics=("parallel", "parallel", "arbitrary"),
                vmem_limit_bytes=vmem_limit,
            ),
            cost_estimate=cost,
        )

    if use_single_buf:
        try:
            out2d = build(pl.Buffered(1))(x2d, weight_kn)
        except Exception:
            # Fallback if single-buffering via pipeline_mode is unavailable.
            out2d = build(None)(x2d, weight_kn)
    else:
        out2d = build(None)(x2d, weight_kn)

    if padded:
        out2d = out2d[:M]
    return out2d.reshape(B, S, N)


def init_projector_weight(key, llm_dim, vision_dim, dtype=jnp.float32):
    """Deterministic kaiming_uniform_ equivalent (a=0 -> bound = sqrt(6/fan_in)),
    in the PyTorch nn.Linear layout [llm_dim, vision_dim]."""
    bound = jnp.sqrt(6.0 / vision_dim)
    return jax.random.uniform(
        key, (llm_dim, vision_dim), dtype=dtype, minval=-bound, maxval=bound
    )


if __name__ == "__main__":
    # Small shapes consistent with the module (real model: seq=729, vision=1152,
    # llm=2048).  seq=9 deliberately not a multiple of 8 so the masked partial
    # M block (the no-jnp.pad path) is exercised, mirroring the real seq=729.
    B, S, VISION_DIM, LLM_DIM = 2, 9, 256, 256

    key = jax.random.PRNGKey(0)
    kx, kw = jax.random.split(key)

    vision_features = jax.random.normal(kx, (B, S, VISION_DIM), dtype=jnp.float32)
    weight_nk = init_projector_weight(kw, LLM_DIM, VISION_DIM)     # PyTorch [N, K]

    ref = jnp.einsum("bsk,nk->bsn", vision_features, weight_nk)

    # 1) f32 weights, default full-K/full-N fast path: single-buffered constant
    #    weight block, partial final M block masked (no pad / slice passes).
    w_f32 = prepare_projector_weight(weight_nk, dtype=jnp.float32)
    out = jax.block_until_ready(prismatic_projector_forward(vision_features, w_f32))
    assert out.shape == (B, S, LLM_DIM)
    assert jnp.allclose(out, ref, atol=1e-5, rtol=1e-5)

    # 2) Tiled N/K path: exercises the multi-K accumulator kernel.
    out_tiled = jax.block_until_ready(
        prismatic_projector_forward(vision_features, w_f32, tm=8, tn=128, tk=128)
    )
    assert jnp.allclose(out_tiled, ref, atol=1e-5, rtol=1e-5)

    # 3) Persistent bf16 weight (recommended deployment config on v6e/v7x):
    #    activation cast happens inside the kernel, accumulation stays f32.
    w_bf16 = prepare_projector_weight(weight_nk)                   # bf16, [K, N]
    out_bf16 = jax.block_until_ready(
        prismatic_projector_forward(vision_features, w_bf16)
    )
    assert out_bf16.dtype == vision_features.dtype
    assert jnp.allclose(out_bf16, ref, atol=5e-2, rtol=5e-2)

    print("KERNEL_OK")
</pallas_src>

<mosaic_0001>
module attributes {stable_mosaic.version = 11 : i64} {
  func.func @_proj_kernel_single_k(%arg0: i32, %arg1: i32, %arg2: i32, %arg3: memref<16x256xf32, #tpu.memory_space<vmem>>, %arg4: memref<256x256xf32, #tpu.memory_space<vmem>>, %arg5: memref<16x256xf32, #tpu.memory_space<vmem>>) attributes {dimension_semantics = [#tpu.dimension_semantics<parallel>, #tpu.dimension_semantics<parallel>, #tpu.dimension_semantics<arbitrary>], iteration_bounds = array<i64: 1, 2, 1>, scalar_prefetch = 0 : i64, scratch_operands = 0 : i64, tpu.core_type = #tpu.core_type<tc>, window_params = [{transform_indices = @transform_0, window_bounds = array<i64: 16, 256>}, {pipeline_mode = #tpu.pipeline_mode<synchronous>, transform_indices = @transform_1, window_bounds = array<i64: 256, 256>}, {transform_indices = @transform_2, window_bounds = array<i64: 16, 256>}]} {
    %c0 = arith.constant 0 : index
    %c0_0 = arith.constant 0 : index
    %0 = vector.load %arg3[%c0, %c0_0] : memref<16x256xf32, #tpu.memory_space<vmem>>, vector<16x256xf32>
    %c0_1 = arith.constant 0 : index
    %c0_2 = arith.constant 0 : index
    %1 = vector.load %arg4[%c0_1, %c0_2] : memref<256x256xf32, #tpu.memory_space<vmem>>, vector<256x256xf32>
    %cst = arith.constant dense<0.000000e+00> : vector<16x256xf32>
    %2 = tpu.matmul %0, %1, %cst {dimension_numbers = #tpu.dot_dimension_numbers<[1], [0], [0], [1], [0, 0, 1, 1], [], []>} : vector<16x256xf32>, vector<256x256xf32>, vector<16x256xf32> -> vector<16x256xf32>
    %c0_3 = arith.constant 0 : index
    %c0_4 = arith.constant 0 : index
    %3 = vector.load %arg5[%c0_3, %c0_4] : memref<16x256xf32, #tpu.memory_space<vmem>>, vector<16x256xf32>
    tpu.vector_store %arg5[%c0_3, %c0_4], %2 {strides = array<i32>} : memref<16x256xf32, #tpu.memory_space<vmem>>, vector<16x256xf32>,
    return
  }
  func.func @transform_0(%arg0: i32, %arg1: i32, %arg2: i32) -> (i32, i32) {
    %c0_i32 = arith.constant 0 : i32
    return %arg1, %arg2 : i32, i32
  }
  func.func @transform_1(%arg0: i32, %arg1: i32, %arg2: i32) -> (i32, i32) {
    %c0_i32 = arith.constant 0 : i32
    return %arg2, %arg0 : i32, i32
  }
  func.func @transform_2(%arg0: i32, %arg1: i32, %arg2: i32) -> (i32, i32) {
    %c0_i32 = arith.constant 0 : i32
    return %arg1, %arg0 : i32, i32
  }
}

module attributes {stable_mosaic.version = 11 : i64} {
  func.func @_proj_kernel_single_k(%arg0: i32, %arg1: i32, %arg2: i32, %arg3: memref<16x256xf32, #tpu.memory_space<vmem>>, %arg4: memref<256x256xf32, #tpu.memory_space<vmem>>, %arg5: memref<16x256xf32, #tpu.memory_space<vmem>>) attributes {dimension_semantics = [#tpu.dimension_semantics<parallel>, #tpu.dimension_semantics<parallel>, #tpu.dimension_semantics<arbitrary>], iteration_bounds = array<i64: 1, 2, 1>, scalar_prefetch = 0 : i64, scratch_operands = 0 : i64, tpu.core_type = #tpu.core_type<tc>, window_params = [{transform_indices = @transform_0, window_bounds = array<i64: 16, 256>}, {transform_indices = @transform_1, window_bounds = array<i64: 256, 256>}, {transform_indices = @transform_2, window_bounds = array<i64: 16, 256>}]} {
    %c0 = arith.constant 0 : index
    %c0_0 = arith.constant 0 : index
    %0 = vector.load %arg3[%c0, %c0_0] : memref<16x256xf32, #tpu.memory_space<vmem>>, vector<16x256xf32>
    %c0_1 = arith.constant 0 : index
    %c0_2 = arith.constant 0 : index
    %1 = vector.load %arg4[%c0_1, %c0_2] : memref<256x256xf32, #tpu.memory_space<vmem>>, vector<256x256xf32>
    %cst = arith.constant dense<0.000000e+00> : vector<16x256xf32>
    %2 = tpu.matmul %0, %1, %cst {dimension_numbers = #tpu.dot_dimension_numbers<[1], [0], [0], [1], [0, 0, 1, 1], [], []>} : vector<16x256xf32>, vector<256x256xf32>, vector<16x256xf32> -> vector<16x256xf32>
    %c0_3 = arith.constant 0 : index
    %c0_4 = arith.constant 0 : index
    %3 = vector.load %arg5[%c0_3, %c0_4] : memref<16x256xf32, #tpu.memory_space<vmem>>, vector<16x256xf32>
    tpu.vector_store %arg5[%c0_3, %c0_4], %2 {strides = array<i32>} : memref<16x256xf32, #tpu.memory_space<vmem>>, vector<16x256xf32>,
    return
  }
  func.func @transform_0(%arg0: i32, %arg1: i32, %arg2: i32) -> (i32, i32) {
    %c0_i32 = arith.constant 0 : i32
    return %arg1, %arg2 : i32, i32
  }
  func.func @transform_1(%arg0: i32, %arg1: i32, %arg2: i32) -> (i32, i32) {
    %c0_i32 = arith.constant 0 : i32
    return %arg2, %arg0 : i32, i32
  }
  func.func @transform_2(%arg0: i32, %arg1: i32, %arg2: i32) -> (i32, i32) {
    %c0_i32 = arith.constant 0 : i32
    return %arg1, %arg0 : i32, i32
  }
}

</mosaic_0001>

<llo_original>
// kernel: tpu_custom_call.1
$region0: #{tpu_custom_call.1}
  #allocation0 [shape = 'u32[]', space=smem, size = 0x4, offset = 0x4, fixed_abs, tag = 'smem constant byte address 0x4 - core index']
  #allocation1 [shape = 'u32[72,128]{1,0:T(1,128)}', space=vmem, size = 0x9000, scoped, tag = 'internal scratch']
  %s0 = inlined_call_operand.hbm [shape: f32[18,256], index: 0, kind: input, shape index: {}]
  %s1 = inlined_call_operand.hbm [shape: f32[256,256], index: 1, kind: input, shape index: {}]
  %s2 = inlined_call_operand.hbm [shape: f32[18,256], index: 2, kind: output, shape index: {}]
  %s3 = sld [smem:[#allocation0]]
  $region49: #{tpu_custom_call.1} parent=0
    _
  %s5 = ssub.s32 1, %s3
  %s6 = scalar_select 0, %s5, %s3
  $region1: #{tpu_custom_call.1} parent=0
    #allocation2 [shape = 'u8[32768]{0}', space=vmem, size = 0x8000, scoped, tag = 'input window, operand 0']
    #allocation3 [shape = 's32[2]{0}', space=sflag, size = 0x8, scoped, tag = 'scoped memory for tpu_custom_call.1']
    #allocation4 [shape = 's32[2]{0}', space=sflag, size = 0x8, scoped, tag = 'scoped memory for tpu_custom_call.1']
    #allocation5 [shape = 'u8[262144]{0}', space=vmem, size = 0x40000, scoped, tag = 'input window, operand 1, single buffered']
    #allocation6 [shape = 's32[1]{0}', space=sflag, size = 0x4, scoped, tag = 'scoped memory for tpu_custom_call.1']
    #allocation7 [shape = 'u8[32768]{0}', space=vmem, size = 0x8000, scoped, tag = 'output window, operand 0']
    %7 = vsyncpa [#allocation3], 0
    %s8 = scalar_lea.sflag [#allocation3], 1
    %9 = vsyncpa %s8, 0
    %10 = vsyncpa [#allocation6], 0
    %11 = vsyncpa [#allocation4], 0
    %s12 = scalar_lea.sflag [#allocation4], 1
    %13 = vsyncpa %s12, 0
    loop: start=0, step=1, limit=4
    $region2: #{tpu_custom_call.1} parent=1 // loop_pre_header
      _
    $region3: #{tpu_custom_call.1} parent=1 // loop_header
      %s15 = sphi 0, %s19
      %p16 = scmp.ge.s32.totalorder %s15, 4
      %s22 = sphi 0, %s41
      %s23 = sphi 0, %s37
      %s24 = sphi 0, %s33
      %s25 = sphi 0, %s22
      %s26 = sphi 0, %s23
      %s27 = sphi 0, %s24
      %s28 = sphi 0, %s25
      %s29 = sphi 0, %s26
      %s30 = sphi 0, %s27
      %s46 = sphi 0, %s48
      %s49 = sphi 0, %s46
      %s50 = sphi 0, %s49
      %s66 = sphi 0, %s50
      %s74 = sphi 0, %s76
      %s77 = sphi 0, %s74
      %s78 = sphi 0, %s77
      %s94 = sphi 0, %s78
      %s102 = sphi 0, %s104
      %s105 = sphi 0, %s102
      %s106 = sphi 0, %s105
      %s122 = sphi 0, %s106
    $region4: #{tpu_custom_call.1} parent=1 // loop_header_branch
      %18 = sbr.rel (%p16) target = $region8
    $region5: #{tpu_custom_call.1} parent=1 // loop_body
      %s20 = ssub.s32 %s15, 1
      %s21 = ssub.s32 %s15, 2
      %s31 = sadd.s32 1, %s24
      %p32 = scmp.ge.s32.totalorder %s31, 1
      %s33 = scalar_select %p32, 0, %s31
      %s34 = sadd.s32 1, %s23
      %s35 = scalar_select %p32, %s34, %s23
      %p36 = scmp.ge.s32.totalorder %s35, 2
      %s37 = scalar_select %p36, 0, %s35
      %s38 = sadd.s32 1, %s22
      %s39 = scalar_select %p36, %s38, %s22
      %p40 = scmp.ge.s32.totalorder %s39, 1
      %s41 = scalar_select %p40, 0, %s39
      %s42 = ssub.s32 %s23, %s37
      %s43 = ssub.s32 %s24, %s33
      %s44 = sor.u32 %s42, %s43
      %p45 = scmp.eq.s32.totalorder %s44, 0
      %s47 = sadd.s32 %s46, 1
      %s48 = scalar_select %p45, %s46, %s47
      %p51 = pneg %p45
      %p52 = scmp.eq.s32.totalorder %s15, 1
      %p53 = por %p51, %p52
      %p54 = scmp.ne.s32.totalorder %s46, %s49
      %p55 = scmp.eq.s32.totalorder %s15, 0
      %p56 = por %p54, %p55
      %p57 = scmp.ne.s32.totalorder %s46, %s49
      %p58 = scmp.eq.s32.totalorder %s20, 1
      %p59 = por %p57, %p58
      %p60 = scmp.ne.s32.totalorder %s49, %s50
      %p61 = scmp.eq.s32.totalorder %s20, 0
      %p62 = por %p60, %p61
      %p63 = scmp.ne.s32.totalorder %s49, %s50
      %p64 = scmp.eq.s32.totalorder %s21, 1
      %p65 = por %p63, %p64
      %p67 = scmp.ne.s32.totalorder %s50, %s66
      %p68 = scmp.eq.s32.totalorder %s21, 0
      %p69 = por %p67, %p68
      %s70 = ssub.s32 %s24, %s33
      %s71 = ssub.s32 %s22, %s41
      %s72 = sor.u32 %s70, %s71
      %p73 = scmp.eq.s32.totalorder %s72, 0
      %s75 = sadd.s32 %s74, 1
      %s76 = scalar_select %p73, %s74, %s75
      %p79 = pneg %p73
      %p80 = scmp.eq.s32.totalorder %s15, 1
      %p81 = por %p79, %p80
      %p82 = scmp.ne.s32.totalorder %s74, %s77
      %p83 = scmp.eq.s32.totalorder %s15, 0
      %p84 = por %p82, %p83
      %p85 = scmp.ne.s32.totalorder %s74, %s77
      %p86 = scmp.eq.s32.totalorder %s20, 1
      %p87 = por %p85, %p86
      %p88 = scmp.ne.s32.totalorder %s77, %s78
      %p89 = scmp.eq.s32.totalorder %s20, 0
      %p90 = por %p88, %p89
      %p91 = scmp.ne.s32.totalorder %s77, %s78
      %p92 = scmp.eq.s32.totalorder %s21, 1
      %p93 = por %p91, %p92
      %p95 = scmp.ne.s32.totalorder %s78, %s94
      %p96 = scmp.eq.s32.totalorder %s21, 0
      %p97 = por %p95, %p96
      %s98 = ssub.s32 %s23, %s37
      %s99 = ssub.s32 %s22, %s41
      %s100 = sor.u32 %s98, %s99
      %p101 = scmp.eq.s32.totalorder %s100, 0
      %s103 = sadd.s32 %s102, 1
      %s104 = scalar_select %p101, %s102, %s103
      %p107 = pneg %p101
      %p108 = scmp.eq.s32.totalorder %s15, 1
      %p109 = por %p107, %p108
      %p110 = scmp.ne.s32.totalorder %s102, %s105
      %p111 = scmp.eq.s32.totalorder %s15, 0
      %p112 = por %p110, %p111
      %p113 = scmp.ne.s32.totalorder %s102, %s105
      %p114 = scmp.eq.s32.totalorder %s20, 1
      %p115 = por %p113, %p114
      %p116 = scmp.ne.s32.totalorder %s105, %s106
      %p117 = scmp.eq.s32.totalorder %s20, 0
      %p118 = por %p116, %p117
      %p119 = scmp.ne.s32.totalorder %s105, %s106
      %p120 = scmp.eq.s32.totalorder %s21, 1
      %p121 = por %p119, %p120
      %p123 = scmp.ne.s32.totalorder %s106, %s122
      %p124 = scmp.eq.s32.totalorder %s21, 0
      %p125 = por %p123, %p124
      %p126 = scmp.le.s32.totalorder 1, %s15
      %p127 = scmp.lt.s32.totalorder %s15, 3
      %p128 = pnand %p126, %p127
      %p129 = pneg %p128
      // Predicated region
      $region9: #{tpu_custom_call.1} parent=5 // pred_check
        _
      $region10: #{tpu_custom_call.1} parent=5 // pred_check_branch
        %131 = sbr.rel (%p128) target = $region12
      $region11: #{tpu_custom_call.1} parent=5 // pred_region
        %s132 = ssub.s32 %s15, 1
        // Predicated region
        $region13: #{tpu_custom_call.1} parent=11 // pred_check
          %p133 = pneg %p90
        $region14: #{tpu_custom_call.1} parent=11 // pred_check_branch
          %135 = sbr.rel (%p133) target = $region16
        $region15: #{tpu_custom_call.1} parent=11 // pred_region
          %s136 = smul.u32 32, %s27
          %s137 = smul.u32 2, %s25
          %139 = vsyncadd [#allocation6], 0
          %s140 = smul.addr %s136, 2
          %s141 = sadd.s32 %s137, %s140
          %s142 = smul.addr %s141, 8
          %s143 = scalar_lea.hbm %s1, %s142
          %s144 = sshll.u32 %s143, 4
          %s145 = int_to_ptr.hbm [resolvable:$true] %s144
          %s146 = sshll.u32 [#allocation5], 4
          %s147 = int_to_ptr.vmem [resolvable:$true] %s146
          %152 = dma.hbm_to_vmem [thread:$0]  %s145, 8192, %s147, [#allocation6], 256, 256, 16
        $region16: #{tpu_custom_call.1} parent=11 // pred_fallthru
          _
      $region12: #{tpu_custom_call.1} parent=5 // pred_fallthru
        _
      %p153 = scmp.lt.s32.totalorder %s15, 2
      // Predicated region
      $region17: #{tpu_custom_call.1} parent=5 // pred_check
        %p154 = pneg %p153
      $region18: #{tpu_custom_call.1} parent=5 // pred_check_branch
        %156 = sbr.rel (%p154) target = $region20
      $region19: #{tpu_custom_call.1} parent=5 // pred_region
        // Predicated region
        $region21: #{tpu_custom_call.1} parent=19 // pred_check
          %p157 = pneg %p56
        $region22: #{tpu_custom_call.1} parent=19 // pred_check_branch
          %159 = sbr.rel (%p157) target = $region24
        $region23: #{tpu_custom_call.1} parent=19 // pred_region
          %s160 = sand.u32 %s46, 1
          %s161 = scalar_lea.sflag [#allocation3], %s160
          %s162 = sand.u32 %s46, 1
          %s163 = smul.addr %s162, 32
          %s164 = scalar_lea.vmem [#allocation2], %s163
          %s165 = smul.u32 2, %s23
          %s166 = smul.u32 2, %s24
          %s167 = ssub.s32 3, %s165
          %p168 = scmp.lt.s32.totalorder %s167, 2
          %s169 = scalar_select %p168, %s167, 2
          %s170 = smul.u32 8, %s169
          %s171 = smul.u32 %s170, 2
          %s172 = ssub.s32 32, %s171
          %s173 = sshll.u32 %s172, 4
          %174 = vsyncadd %s161, %s173
          %p175 = scmp.ne.s32.totalorder 0, %s171
          %s176 = smul.addr %s165, 2
          %s177 = sadd.s32 %s166, %s176
          %s178 = smul.addr %s177, 8
          %s179 = scalar_lea.hbm %s0, %s178
          %s180 = smul.u32 16, %s169
          %s181 = sshll.u32 %s179, 4
          %s182 = int_to_ptr.hbm [resolvable:$true] %s181
          %s183 = sshll.u32 %s164, 4
          %s184 = int_to_ptr.vmem [resolvable:$true] %s183
          %s185 = sshll.u32 %s180, 4
          %189 = dma.hbm_to_vmem [thread:$0]  (%p175), %s182, %s185, %s184, %s161, 256, 256, 16
        $region24: #{tpu_custom_call.1} parent=19 // pred_fallthru
          _
      $region20: #{tpu_custom_call.1} parent=5 // pred_fallthru
        _
      %p190 = scmp.le.s32.totalorder 1, %s15
      %p191 = scmp.lt.s32.totalorder %s15, 3
      %p192 = pnand %p190, %p191
      %p193 = pneg %p192
      // Predicated region
      $region25: #{tpu_custom_call.1} parent=5 // pred_check
        _
      $region26: #{tpu_custom_call.1} parent=5 // pred_check_branch
        %195 = sbr.rel (%p192) target = $region28
      $region27: #{tpu_custom_call.1} parent=5 // pred_region
        %s196 = ssub.s32 %s15, 1
        %s197 = sand.u32 %s49, 1
        %s198 = scalar_lea.sflag [#allocation3], %s197
        %s199 = sand.u32 %s49, 1
        %s200 = smul.addr %s199, 32
        %s201 = scalar_lea.vmem [#allocation2], %s200
        // Predicated region
        $region29: #{tpu_custom_call.1} parent=27 // pred_check
          %p202 = pneg %p62
        $region30: #{tpu_custom_call.1} parent=27 // pred_check_branch
          %204 = sbr.rel (%p202) target = $region32
        $region31: #{tpu_custom_call.1} parent=27 // pred_region
          %206 = dma.done %s198, 512
        $region32: #{tpu_custom_call.1} parent=27 // pred_fallthru
          _
        // Predicated region
        $region33: #{tpu_custom_call.1} parent=27 // pred_check
          %p207 = pneg %p90
        $region34: #{tpu_custom_call.1} parent=27 // pred_check_branch
          %209 = sbr.rel (%p207) target = $region36
        $region35: #{tpu_custom_call.1} parent=27 // pred_region
          %211 = dma.done [#allocation6], 8192
        $region36: #{tpu_custom_call.1} parent=27 // pred_fallthru
          _
        %s212 = sand.u32 %s49, 1
        %s213 = scalar_lea.sflag [#allocation3], %s212
        %s214 = sand.u32 %s49, 1
        %s215 = smul.addr %s214, 32
        %s216 = scalar_lea.vmem [#allocation2], %s215
        %p217 = pneg %p62
        %p218 = pneg %p59
        %p219 = pneg %p90
        %p220 = pneg %p87
        %p221 = pneg %p118
        %p222 = pneg %p115
        %s223 = sand.u32 %s105, 1
        %s224 = scalar_lea.sflag [#allocation4], %s223
        %s225 = sand.u32 %s105, 1
        %s226 = smul.addr %s225, 32
        %s227 = scalar_lea.vmem [#allocation7], %s226
        %s228 = smul.u32 2, %s26
        %s229 = smul.u32 2, %s27
        %s230 = ssub.s32 3, %s228
        %p231 = scmp.lt.s32.totalorder %s230, 2
        %s232 = scalar_select %p231, %s230, 2
        %s233 = smul.u32 8, %s232
        %s234 = smul.u32 %s233, 2
        %s235 = smul.u32 32, %s27
        %s236 = smul.u32 2, %s25
        %s237 = smul.u32 2, %s26
        %s238 = smul.u32 2, %s25
        %s239 = ssub.s32 3, %s237
        %p240 = scmp.lt.s32.totalorder %s239, 2
        %s241 = scalar_select %p240, %s239, 2
        %s242 = smul.u32 8, %s241
        %s243 = smul.u32 %s242, 2
        %v244 = vld [vmem:[%s201] sm:$0xff]
        %v245 = vld [vmem:[%s201 + $0x8] sm:$0xff]
        %v246 = vld [vmem:[%s201 + $0x10] sm:$0xff]
        %v247 = vld [vmem:[%s201 + $0x18] sm:$0xff]
        %v248 = vld [vmem:[#allocation5] sm:$0xff]
        %v249 = vld [vmem:[#allocation5 + $0x8] sm:$0xff]
        %v250 = vld [vmem:[#allocation5 + $0x10] sm:$0xff]
        %v251 = vld [vmem:[#allocation5 + $0x18] sm:$0xff]
        %v252 = vld [vmem:[#allocation5 + $0x20] sm:$0xff]
        %v253 = vld [vmem:[#allocation5 + $0x28] sm:$0xff]
        %v254 = vld [vmem:[#allocation5 + $0x30] sm:$0xff]
        %v255 = vld [vmem:[#allocation5 + $0x38] sm:$0xff]
        %v256 = vld [vmem:[#allocation5 + $0x40] sm:$0xff]
        %v257 = vld [vmem:[#allocation5 + $0x48] sm:$0xff]
        %v258 = vld [vmem:[#allocation5 + $0x50] sm:$0xff]
        %v259 = vld [vmem:[#allocation5 + $0x58] sm:$0xff]
        %v260 = vld [vmem:[#allocation5 + $0x60] sm:$0xff]
        %v261 = vld [vmem:[#allocation5 + $0x68] sm:$0xff]
        %v262 = vld [vmem:[#allocation5 + $0x70] sm:$0xff]
        %v263 = vld [vmem:[#allocation5 + $0x78] sm:$0xff]
        %v264 = vld [vmem:[#allocation5 + $0x80] sm:$0xff]
        %v265 = vld [vmem:[#allocation5 + $0x88] sm:$0xff]
        %v266 = vld [vmem:[#allocation5 + $0x90] sm:$0xff]
        %v267 = vld [vmem:[#allocation5 + $0x98] sm:$0xff]
        %v268 = vld [vmem:[#allocation5 + $0xa0] sm:$0xff]
        %v269 = vld [vmem:[#allocation5 + $0xa8] sm:$0xff]
        %v270 = vld [vmem:[#allocation5 + $0xb0] sm:$0xff]
        %v271 = vld [vmem:[#allocation5 + $0xb8] sm:$0xff]
        %v272 = vld [vmem:[#allocation5 + $0xc0] sm:$0xff]
        %v273 = vld [vmem:[#allocation5 + $0xc8] sm:$0xff]
        %v274 = vld [vmem:[#allocation5 + $0xd0] sm:$0xff]
        %v275 = vld [vmem:[#allocation5 + $0xd8] sm:$0xff]
        %v276 = vld [vmem:[#allocation5 + $0xe0] sm:$0xff]
        %v277 = vld [vmem:[#allocation5 + $0xe8] sm:$0xff]
        %v278 = vld [vmem:[#allocation5 + $0xf0] sm:$0xff]
        %v279 = vld [vmem:[#allocation5 + $0xf8] sm:$0xff]
        %v280 = vld [vmem:[#allocation5 + $0x100] sm:$0xff]
        %v281 = vld [vmem:[#allocation5 + $0x108] sm:$0xff]
        %v282 = vld [vmem:[#allocation5 + $0x110] sm:$0xff]
        %v283 = vld [vmem:[#allocation5 + $0x118] sm:$0xff]
        %v284 = vld [vmem:[#allocation5 + $0x120] sm:$0xff]
        %v285 = vld [vmem:[#allocation5 + $0x128] sm:$0xff]
        %v286 = vld [vmem:[#allocation5 + $0x130] sm:$0xff]
        %v287 = vld [vmem:[#allocation5 + $0x138] sm:$0xff]
        %v288 = vld [vmem:[#allocation5 + $0x140] sm:$0xff]
        %v289 = vld [vmem:[#allocation5 + $0x148] sm:$0xff]
        %v290 = vld [vmem:[#allocation5 + $0x150] sm:$0xff]
        %v291 = vld [vmem:[#allocation5 + $0x158] sm:$0xff]
        %v292 = vld [vmem:[#allocation5 + $0x160] sm:$0xff]
        %v293 = vld [vmem:[#allocation5 + $0x168] sm:$0xff]
        %v294 = vld [vmem:[#allocation5 + $0x170] sm:$0xff]
        %v295 = vld [vmem:[#allocation5 + $0x178] sm:$0xff]
        %v296 = vld [vmem:[#allocation5 + $0x180] sm:$0xff]
        %v297 = vld [vmem:[#allocation5 + $0x188] sm:$0xff]
        %v298 = vld [vmem:[#allocation5 + $0x190] sm:$0xff]
        %v299 = vld [vmem:[#allocation5 + $0x198] sm:$0xff]
        %v300 = vld [vmem:[#allocation5 + $0x1a0] sm:$0xff]
        %v301 = vld [vmem:[#allocation5 + $0x1a8] sm:$0xff]
        %v302 = vld [vmem:[#allocation5 + $0x1b0] sm:$0xff]
        %v303 = vld [vmem:[#allocation5 + $0x1b8] sm:$0xff]
        %v304 = vld [vmem:[#allocation5 + $0x1c0] sm:$0xff]
        %v305 = vld [vmem:[#allocation5 + $0x1c8] sm:$0xff]
        %v306 = vld [vmem:[#allocation5 + $0x1d0] sm:$0xff]
        %v307 = vld [vmem:[#allocation5 + $0x1d8] sm:$0xff]
        %v308 = vld [vmem:[#allocation5 + $0x1e0] sm:$0xff]
        %v309 = vld [vmem:[#allocation5 + $0x1e8] sm:$0xff]
        %v310 = vld [vmem:[#allocation5 + $0x1f0] sm:$0xff]
        %v311 = vld [vmem:[#allocation5 + $0x1f8] sm:$0xff]
        %312 = vmatpush.msra.mxu0 %v278
        %313 = vmatpush.msra.mxu0 %v276
        %314 = vmatpush.msra.mxu0 %v274
        %315 = vmatpush.msra.mxu0 %v272
        %316 = vmatpush.msra.mxu0 %v270
        %317 = vmatpush.msra.mxu0 %v268
        %318 = vmatpush.msra.mxu0 %v266
        %319 = vmatpush.msra.mxu0 %v264
        %320 = vmatpush.msra.mxu0 %v262
        %321 = vmatpush.msra.mxu0 %v260
        %322 = vmatpush.msra.mxu0 %v258
        %323 = vmatpush.msra.mxu0 %v256
        %324 = vmatpush.msra.mxu0 %v254
        %325 = vmatpush.msra.mxu0 %v252
        %326 = vmatpush.msra.mxu0 %v250
        %327 = vmatpush.msra.mxu0 %v248
        %328 = vmatmul.f32.gmra.mxu0 %v244
        %v329 = vpop.f32.mrf.mxu0
        %v330 = vadd.f32 0.0, %v329
        %331 = vmatmul.f32.gmra.mxu0 %v246
        %v332 = vpop.f32.mrf.mxu0
        %v333 = vadd.f32 0.0, %v332
        %334 = vdwg.mxu0
        %335 = vmatpush.msra.mxu0 %v310
        %336 = vmatpush.msra.mxu0 %v308
        %337 = vmatpush.msra.mxu0 %v306
        %338 = vmatpush.msra.mxu0 %v304
        %339 = vmatpush.msra.mxu0 %v302
        %340 = vmatpush.msra.mxu0 %v300
        %341 = vmatpush.msra.mxu0 %v298
        %342 = vmatpush.msra.mxu0 %v296
        %343 = vmatpush.msra.mxu0 %v294
        %344 = vmatpush.msra.mxu0 %v292
        %345 = vmatpush.msra.mxu0 %v290
        %346 = vmatpush.msra.mxu0 %v288
        %347 = vmatpush.msra.mxu0 %v286
        %348 = vmatpush.msra.mxu0 %v284
        %349 = vmatpush.msra.mxu0 %v282
        %350 = vmatpush.msra.mxu0 %v280
        %351 = vmatmul.f32.gmra.mxu0 %v245
        %v352 = vpop.f32.mrf.mxu0
        %v353 = vadd.f32 %v330, %v352
        %354 = vmatmul.f32.gmra.mxu0 %v247
        %v355 = vpop.f32.mrf.mxu0
        %v356 = vadd.f32 %v333, %v355
        %357 = vdwg.mxu0
        %358 = vmatpush.msra.mxu0 %v279
        %359 = vmatpush.msra.mxu0 %v277
        %360 = vmatpush.msra.mxu0 %v275
        %361 = vmatpush.msra.mxu0 %v273
        %362 = vmatpush.msra.mxu0 %v271
        %363 = vmatpush.msra.mxu0 %v269
        %364 = vmatpush.msra.mxu0 %v267
        %365 = vmatpush.msra.mxu0 %v265
        %366 = vmatpush.msra.mxu0 %v263
        %367 = vmatpush.msra.mxu0 %v261
        %368 = vmatpush.msra.mxu0 %v259
        %369 = vmatpush.msra.mxu0 %v257
        %370 = vmatpush.msra.mxu0 %v255
        %371 = vmatpush.msra.mxu0 %v253
        %372 = vmatpush.msra.mxu0 %v251
        %373 = vmatpush.msra.mxu0 %v249
        %374 = vmatmul.f32.gmra.mxu0 %v244
        %v375 = vpop.f32.mrf.mxu0
        %v376 = vadd.f32 0.0, %v375
        %377 = vmatmul.f32.gmra.mxu0 %v246
        %v378 = vpop.f32.mrf.mxu0
        %v379 = vadd.f32 0.0, %v378
        %380 = vdwg.mxu0
        %381 = vmatpush.msra.mxu0 %v311
        %382 = vmatpush.msra.mxu0 %v309
        %383 = vmatpush.msra.mxu0 %v307
        %384 = vmatpush.msra.mxu0 %v305
        %385 = vmatpush.msra.mxu0 %v303
        %386 = vmatpush.msra.mxu0 %v301
        %387 = vmatpush.msra.mxu0 %v299
        %388 = vmatpush.msra.mxu0 %v297
        %389 = vmatpush.msra.mxu0 %v295
        %390 = vmatpush.msra.mxu0 %v293
        %391 = vmatpush.msra.mxu0 %v291
        %392 = vmatpush.msra.mxu0 %v289
        %393 = vmatpush.msra.mxu0 %v287
        %394 = vmatpush.msra.mxu0 %v285
        %395 = vmatpush.msra.mxu0 %v283
        %396 = vmatpush.msra.mxu0 %v281
        %397 = vmatmul.f32.gmra.mxu0 %v245
        %v398 = vpop.f32.mrf.mxu0
        %v399 = vadd.f32 %v376, %v398
        %400 = vmatmul.f32.gmra.mxu0 %v247
        %v401 = vpop.f32.mrf.mxu0
        %v402 = vadd.f32 %v379, %v401
        %403 = vdwg.mxu0
        %404 = vst [vmem:[%s227] sm:$0xff] %v353
        %405 = vst [vmem:[%s227 + $0x8] sm:$0xff] %v399
        %406 = vst [vmem:[%s227 + $0x10] sm:$0xff] %v356
        %407 = vst [vmem:[%s227 + $0x18] sm:$0xff] %v402
        %s408 = sand.u32 %s105, 1
        %s409 = scalar_lea.sflag [#allocation4], %s408
        %s410 = sand.u32 %s105, 1
        %s411 = smul.addr %s410, 32
        %s412 = scalar_lea.vmem [#allocation7], %s411
        // Predicated region
        $region37: #{tpu_custom_call.1} parent=27 // pred_check
          %p413 = pneg %p115
        $region38: #{tpu_custom_call.1} parent=27 // pred_check_branch
          %415 = sbr.rel (%p413) target = $region40
        $region39: #{tpu_custom_call.1} parent=27 // pred_region
          %s416 = smul.u32 2, %s26
          %s417 = smul.u32 2, %s25
          %s418 = ssub.s32 3, %s416
          %p419 = scmp.lt.s32.totalorder %s418, 2
          %s420 = scalar_select %p419, %s418, 2
          %s421 = smul.u32 8, %s420
          %s422 = smul.u32 %s421, 2
          %s423 = ssub.s32 32, %s422
          %s424 = sshll.u32 %s423, 4
          %425 = vsyncadd %s409, %s424
          %p426 = scmp.ne.s32.totalorder 0, %s422
          %s427 = smul.addr %s416, 2
          %s428 = sadd.s32 %s417, %s427
          %s429 = smul.addr %s428, 8
          %s430 = scalar_lea.hbm %s2, %s429
          %s431 = smul.u32 16, %s420
          %s432 = sshll.u32 %s412, 4
          %s433 = int_to_ptr.vmem [resolvable:$true] %s432
          %s434 = sshll.u32 %s430, 4
          %s435 = int_to_ptr.hbm [resolvable:$true] %s434
          %s436 = sshll.u32 %s431, 4
          %440 = dma.vmem_to_hbm [thread:$0]  (%p426), %s433, %s436, %s435, %s409, 256, 256, 16
        $region40: #{tpu_custom_call.1} parent=27 // pred_fallthru
          _
      $region28: #{tpu_custom_call.1} parent=5 // pred_fallthru
        _
      %p441 = scmp.le.s32.totalorder 2, %s15
      // Predicated region
      $region41: #{tpu_custom_call.1} parent=5 // pred_check
        %p442 = pneg %p441
      $region42: #{tpu_custom_call.1} parent=5 // pred_check_branch
        %444 = sbr.rel (%p442) target = $region44
      $region43: #{tpu_custom_call.1} parent=5 // pred_region
        %s445 = ssub.s32 %s15, 2
        // Predicated region
        $region45: #{tpu_custom_call.1} parent=43 // pred_check
          %p446 = pneg %p121
        $region46: #{tpu_custom_call.1} parent=43 // pred_check_branch
          %448 = sbr.rel (%p446) target = $region48
        $region47: #{tpu_custom_call.1} parent=43 // pred_region
          %s449 = sand.u32 %s106, 1
          %s450 = scalar_lea.sflag [#allocation4], %s449
          %s451 = sand.u32 %s106, 1
          %s452 = smul.addr %s451, 32
          %s453 = scalar_lea.vmem [#allocation7], %s452
          %455 = dma.done %s450, 512
        $region48: #{tpu_custom_call.1} parent=43 // pred_fallthru
          _
      $region44: #{tpu_custom_call.1} parent=5 // pred_fallthru
        _
    $region6: #{tpu_custom_call.1} parent=1 // loop_footer
      %s19 = sadd.s32 1, %s15
    $region7: #{tpu_custom_call.1} parent=1 // loop_footer_branch
      %14 = sbr.rel target = $region3
    $region8: #{tpu_custom_call.1} parent=1 // loop_exit
      _
    %456 = vsyncpa [#allocation3], 1
    %s457 = scalar_lea.sflag [#allocation3], 1
    %458 = vsyncpa %s457, 1
    %459 = vsyncpa [#allocation6], 1
    %460 = vsyncpa [#allocation4], 1
    %s461 = scalar_lea.sflag [#allocation4], 1
    %462 = vsyncpa %s461, 1

// kernel: tpu_custom_call.1
$region0: #{tpu_custom_call.1}
  #allocation0 [shape = 'u32[]', space=smem, size = 0x4, offset = 0x4, fixed_abs, tag = 'smem constant byte address 0x4 - core index']
  #allocation1 [shape = 'u32[72,128]{1,0:T(1,128)}', space=vmem, size = 0x9000, scoped, tag = 'internal scratch']
  %s0 = inlined_call_operand.hbm [shape: f32[18,256], index: 0, kind: input, shape index: {}]
  %s1 = inlined_call_operand.hbm [shape: f32[256,256], index: 1, kind: input, shape index: {}]
  %s2 = inlined_call_operand.hbm [shape: f32[18,256], index: 2, kind: output, shape index: {}]
  %s3 = sld [smem:[#allocation0]]
  $region49: #{tpu_custom_call.1} parent=0
    _
  %s5 = ssub.s32 1, %s3
  %s6 = scalar_select 0, %s5, %s3
  $region1: #{tpu_custom_call.1} parent=0
    #allocation2 [shape = 'u8[32768]{0}', space=vmem, size = 0x8000, scoped, tag = 'input window, operand 0']
    #allocation3 [shape = 's32[2]{0}', space=sflag, size = 0x8, scoped, tag = 'scoped memory for tpu_custom_call.1']
    #allocation4 [shape = 's32[2]{0}', space=sflag, size = 0x8, scoped, tag = 'scoped memory for tpu_custom_call.1']
    #allocation5 [shape = 'u8[262144]{0}', space=vmem, size = 0x40000, scoped, tag = 'input window, operand 1, single buffered']
    #allocation6 [shape = 's32[1]{0}', space=sflag, size = 0x4, scoped, tag = 'scoped memory for tpu_custom_call.1']
    #allocation7 [shape = 'u8[32768]{0}', space=vmem, size = 0x8000, scoped, tag = 'output window, operand 0']
    %7 = vsyncpa [#allocation3], 0
    %s8 = scalar_lea.sflag [#allocation3], 1
    %9 = vsyncpa %s8, 0
    %10 = vsyncpa [#allocation6], 0
    %11 = vsyncpa [#allocation4], 0
    %s12 = scalar_lea.sflag [#allocation4], 1
    %13 = vsyncpa %s12, 0
    loop: start=0, step=1, limit=4
    $region2: #{tpu_custom_call.1} parent=1 // loop_pre_header
      _
    $region3: #{tpu_custom_call.1} parent=1 // loop_header
      %s15 = sphi 0, %s19
      %p16 = scmp.ge.s32.totalorder %s15, 4
      %s22 = sphi 0, %s41
      %s23 = sphi 0, %s37
      %s24 = sphi 0, %s33
      %s25 = sphi 0, %s22
      %s26 = sphi 0, %s23
      %s27 = sphi 0, %s24
      %s28 = sphi 0, %s25
      %s29 = sphi 0, %s26
      %s30 = sphi 0, %s27
      %s46 = sphi 0, %s48
      %s49 = sphi 0, %s46
      %s50 = sphi 0, %s49
      %s66 = sphi 0, %s50
      %s74 = sphi 0, %s76
      %s77 = sphi 0, %s74
      %s78 = sphi 0, %s77
      %s94 = sphi 0, %s78
      %s102 = sphi 0, %s104
      %s105 = sphi 0, %s102
      %s106 = sphi 0, %s105
      %s122 = sphi 0, %s106
    $region4: #{tpu_custom_call.1} parent=1 // loop_header_branch
      %18 = sbr.rel (%p16) target = $region8
    $region5: #{tpu_custom_call.1} parent=1 // loop_body
      %s20 = ssub.s32 %s15, 1
      %s21 = ssub.s32 %s15, 2
      %s31 = sadd.s32 1, %s24
      %p32 = scmp.ge.s32.totalorder %s31, 1
      %s33 = scalar_select %p32, 0, %s31
      %s34 = sadd.s32 1, %s23
      %s35 = scalar_select %p32, %s34, %s23
      %p36 = scmp.ge.s32.totalorder %s35, 2
      %s37 = scalar_select %p36, 0, %s35
      %s38 = sadd.s32 1, %s22
      %s39 = scalar_select %p36, %s38, %s22
      %p40 = scmp.ge.s32.totalorder %s39, 1
      %s41 = scalar_select %p40, 0, %s39
      %s42 = ssub.s32 %s23, %s37
      %s43 = ssub.s32 %s24, %s33
      %s44 = sor.u32 %s42, %s43
      %p45 = scmp.eq.s32.totalorder %s44, 0
      %s47 = sadd.s32 %s46, 1
      %s48 = scalar_select %p45, %s46, %s47
      %p51 = pneg %p45
      %p52 = scmp.eq.s32.totalorder %s15, 1
      %p53 = por %p51, %p52
      %p54 = scmp.ne.s32.totalorder %s46, %s49
      %p55 = scmp.eq.s32.totalorder %s15, 0
      %p56 = por %p54, %p55
      %p57 = scmp.ne.s32.totalorder %s46, %s49
      %p58 = scmp.eq.s32.totalorder %s20, 1
      %p59 = por %p57, %p58
      %p60 = scmp.ne.s32.totalorder %s49, %s50
      %p61 = scmp.eq.s32.totalorder %s20, 0
      %p62 = por %p60, %p61
      %p63 = scmp.ne.s32.totalorder %s49, %s50
      %p64 = scmp.eq.s32.totalorder %s21, 1
      %p65 = por %p63, %p64
      %p67 = scmp.ne.s32.totalorder %s50, %s66
      %p68 = scmp.eq.s32.totalorder %s21, 0
      %p69 = por %p67, %p68
      %s70 = ssub.s32 %s24, %s33
      %s71 = ssub.s32 %s22, %s41
      %s72 = sor.u32 %s70, %s71
      %p73 = scmp.eq.s32.totalorder %s72, 0
      %s75 = sadd.s32 %s74, 1
      %s76 = scalar_select %p73, %s74, %s75
      %p79 = pneg %p73
      %p80 = scmp.eq.s32.totalorder %s15, 1
      %p81 = por %p79, %p80
      %p82 = scmp.ne.s32.totalorder %s74, %s77
      %p83 = scmp.eq.s32.totalorder %s15, 0
      %p84 = por %p82, %p83
      %p85 = scmp.ne.s32.totalorder %s74, %s77
      %p86 = scmp.eq.s32.totalorder %s20, 1
      %p87 = por %p85, %p86
      %p88 = scmp.ne.s32.totalorder %s77, %s78
      %p89 = scmp.eq.s32.totalorder %s20, 0
      %p90 = por %p88, %p89
      %p91 = scmp.ne.s32.totalorder %s77, %s78
      %p92 = scmp.eq.s32.totalorder %s21, 1
      %p93 = por %p91, %p92
      %p95 = scmp.ne.s32.totalorder %s78, %s94
      %p96 = scmp.eq.s32.totalorder %s21, 0
      %p97 = por %p95, %p96
      %s98 = ssub.s32 %s23, %s37
      %s99 = ssub.s32 %s22, %s41
      %s100 = sor.u32 %s98, %s99
      %p101 = scmp.eq.s32.totalorder %s100, 0
      %s103 = sadd.s32 %s102, 1
      %s104 = scalar_select %p101, %s102, %s103
      %p107 = pneg %p101
      %p108 = scmp.eq.s32.totalorder %s15, 1
      %p109 = por %p107, %p108
      %p110 = scmp.ne.s32.totalorder %s102, %s105
      %p111 = scmp.eq.s32.totalorder %s15, 0
      %p112 = por %p110, %p111
      %p113 = scmp.ne.s32.totalorder %s102, %s105
      %p114 = scmp.eq.s32.totalorder %s20, 1
      %p115 = por %p113, %p114
      %p116 = scmp.ne.s32.totalorder %s105, %s106
      %p117 = scmp.eq.s32.totalorder %s20, 0
      %p118 = por %p116, %p117
      %p119 = scmp.ne.s32.totalorder %s105, %s106
      %p120 = scmp.eq.s32.totalorder %s21, 1
      %p121 = por %p119, %p120
      %p123 = scmp.ne.s32.totalorder %s106, %s122
      %p124 = scmp.eq.s32.totalorder %s21, 0
      %p125 = por %p123, %p124
      %p126 = scmp.le.s32.totalorder 1, %s15
      %p127 = scmp.lt.s32.totalorder %s15, 3
      %p128 = pnand %p126, %p127
      %p129 = pneg %p128
      // Predicated region
      $region9: #{tpu_custom_call.1} parent=5 // pred_check
        _
      $region10: #{tpu_custom_call.1} parent=5 // pred_check_branch
        %131 = sbr.rel (%p128) target = $region12
      $region11: #{tpu_custom_call.1} parent=5 // pred_region
        %s132 = ssub.s32 %s15, 1
        // Predicated region
        $region13: #{tpu_custom_call.1} parent=11 // pred_check
          %p133 = pneg %p90
        $region14: #{tpu_custom_call.1} parent=11 // pred_check_branch
          %135 = sbr.rel (%p133) target = $region16
        $region15: #{tpu_custom_call.1} parent=11 // pred_region
          %s136 = smul.u32 32, %s27
          %s137 = smul.u32 2, %s25
          %139 = vsyncadd [#allocation6], 0
          %s140 = smul.addr %s136, 2
          %s141 = sadd.s32 %s137, %s140
          %s142 = smul.addr %s141, 8
          %s143 = scalar_lea.hbm %s1, %s142
          %s144 = sshll.u32 %s143, 4
          %s145 = int_to_ptr.hbm [resolvable:$true] %s144
          %s146 = sshll.u32 [#allocation5], 4
          %s147 = int_to_ptr.vmem [resolvable:$true] %s146
          %152 = dma.hbm_to_vmem [thread:$0]  %s145, 8192, %s147, [#allocation6], 256, 256, 16
        $region16: #{tpu_custom_call.1} parent=11 // pred_fallthru
          _
      $region12: #{tpu_custom_call.1} parent=5 // pred_fallthru
        _
      %p153 = scmp.lt.s32.totalorder %s15, 2
      // Predicated region
      $region17: #{tpu_custom_call.1} parent=5 // pred_check
        %p154 = pneg %p153
      $region18: #{tpu_custom_call.1} parent=5 // pred_check_branch
        %156 = sbr.rel (%p154) target = $region20
      $region19: #{tpu_custom_call.1} parent=5 // pred_region
        // Predicated region
        $region21: #{tpu_custom_call.1} parent=19 // pred_check
          %p157 = pneg %p56
        $region22: #{tpu_custom_call.1} parent=19 // pred_check_branch
          %159 = sbr.rel (%p157) target = $region24
        $region23: #{tpu_custom_call.1} parent=19 // pred_region
          %s160 = sand.u32 %s46, 1
          %s161 = scalar_lea.sflag [#allocation3], %s160
          %s162 = sand.u32 %s46, 1
          %s163 = smul.addr %s162, 32
          %s164 = scalar_lea.vmem [#allocation2], %s163
          %s165 = smul.u32 2, %s23
          %s166 = smul.u32 2, %s24
          %s167 = ssub.s32 3, %s165
          %p168 = scmp.lt.s32.totalorder %s167, 2
          %s169 = scalar_select %p168, %s167, 2
          %s170 = smul.u32 8, %s169
          %s171 = smul.u32 %s170, 2
          %s172 = ssub.s32 32, %s171
          %s173 = sshll.u32 %s172, 4
          %174 = vsyncadd %s161, %s173
          %p175 = scmp.ne.s32.totalorder 0, %s171
          %s176 = smul.addr %s165, 2
          %s177 = sadd.s32 %s166, %s176
          %s178 = smul.addr %s177, 8
          %s179 = scalar_lea.hbm %s0, %s178
          %s180 = smul.u32 16, %s169
          %s181 = sshll.u32 %s179, 4
          %s182 = int_to_ptr.hbm [resolvable:$true] %s181
          %s183 = sshll.u32 %s164, 4
          %s184 = int_to_ptr.vmem [resolvable:$true] %s183
          %s185 = sshll.u32 %s180, 4
          %189 = dma.hbm_to_vmem [thread:$0]  (%p175), %s182, %s185, %s184, %s161, 256, 256, 16
        $region24: #{tpu_custom_call.1} parent=19 // pred_fallthru
          _
      $region20: #{tpu_custom_call.1} parent=5 // pred_fallthru
        _
      %p190 = scmp.le.s32.totalorder 1, %s15
      %p191 = scmp.lt.s32.totalorder %s15, 3
      %p192 = pnand %p190, %p191
      %p193 = pneg %p192
      // Predicated region
      $region25: #{tpu_custom_call.1} parent=5 // pred_check
        _
      $region26: #{tpu_custom_call.1} parent=5 // pred_check_branch
        %195 = sbr.rel (%p192) target = $region28
      $region27: #{tpu_custom_call.1} parent=5 // pred_region
        %s196 = ssub.s32 %s15, 1
        %s197 = sand.u32 %s49, 1
        %s198 = scalar_lea.sflag [#allocation3], %s197
        %s199 = sand.u32 %s49, 1
        %s200 = smul.addr %s199, 32
        %s201 = scalar_lea.vmem [#allocation2], %s200
        // Predicated region
        $region29: #{tpu_custom_call.1} parent=27 // pred_check
          %p202 = pneg %p62
        $region30: #{tpu_custom_call.1} parent=27 // pred_check_branch
          %204 = sbr.rel (%p202) target = $region32
        $region31: #{tpu_custom_call.1} parent=27 // pred_region
          %206 = dma.done %s198, 512
        $region32: #{tpu_custom_call.1} parent=27 // pred_fallthru
          _
        // Predicated region
        $region33: #{tpu_custom_call.1} parent=27 // pred_check
          %p207 = pneg %p90
        $region34: #{tpu_custom_call.1} parent=27 // pred_check_branch
          %209 = sbr.rel (%p207) target = $region36
        $region35: #{tpu_custom_call.1} parent=27 // pred_region
          %211 = dma.done [#allocation6], 8192
        $region36: #{tpu_custom_call.1} parent=27 // pred_fallthru
          _
        %s212 = sand.u32 %s49, 1
        %s213 = scalar_lea.sflag [#allocation3], %s212
        %s214 = sand.u32 %s49, 1
        %s215 = smul.addr %s214, 32
        %s216 = scalar_lea.vmem [#allocation2], %s215
        %p217 = pneg %p62
        %p218 = pneg %p59
        %p219 = pneg %p90
        %p220 = pneg %p87
        %p221 = pneg %p118
        %p222 = pneg %p115
        %s223 = sand.u32 %s105, 1
        %s224 = scalar_lea.sflag [#allocation4], %s223
        %s225 = sand.u32 %s105, 1
        %s226 = smul.addr %s225, 32
        %s227 = scalar_lea.vmem [#allocation7], %s226
        %s228 = smul.u32 2, %s26
        %s229 = smul.u32 2, %s27
        %s230 = ssub.s32 3, %s228
        %p231 = scmp.lt.s32.totalorder %s230, 2
        %s232 = scalar_select %p231, %s230, 2
        %s233 = smul.u32 8, %s232
        %s234 = smul.u32 %s233, 2
        %s235 = smul.u32 32, %s27
        %s236 = smul.u32 2, %s25
        %s237 = smul.u32 2, %s26
        %s238 = smul.u32 2, %s25
        %s239 = ssub.s32 3, %s237
        %p240 = scmp.lt.s32.totalorder %s239, 2
        %s241 = scalar_select %p240, %s239, 2
        %s242 = smul.u32 8, %s241
        %s243 = smul.u32 %s242, 2
        %v244 = vld [vmem:[%s201] sm:$0xff]
        %v245 = vld [vmem:[%s201 + $0x8] sm:$0xff]
        %v246 = vld [vmem:[%s201 + $0x10] sm:$0xff]
        %v247 = vld [vmem:[%s201 + $0x18] sm:$0xff]
        %v248 = vld [vmem:[#allocation5] sm:$0xff]
        %v249 = vld [vmem:[#allocation5 + $0x8] sm:$0xff]
        %v250 = vld [vmem:[#allocation5 + $0x10] sm:$0xff]
        %v251 = vld [vmem:[#allocation5 + $0x18] sm:$0xff]
        %v252 = vld [vmem:[#allocation5 + $0x20] sm:$0xff]
        %v253 = vld [vmem:[#allocation5 + $0x28] sm:$0xff]
        %v254 = vld [vmem:[#allocation5 + $0x30] sm:$0xff]
        %v255 = vld [vmem:[#allocation5 + $0x38] sm:$0xff]
        %v256 = vld [vmem:[#allocation5 + $0x40] sm:$0xff]
        %v257 = vld [vmem:[#allocation5 + $0x48] sm:$0xff]
        %v258 = vld [vmem:[#allocation5 + $0x50] sm:$0xff]
        %v259 = vld [vmem:[#allocation5 + $0x58] sm:$0xff]
        %v260 = vld [vmem:[#allocation5 + $0x60] sm:$0xff]
        %v261 = vld [vmem:[#allocation5 + $0x68] sm:$0xff]
        %v262 = vld [vmem:[#allocation5 + $0x70] sm:$0xff]
        %v263 = vld [vmem:[#allocation5 + $0x78] sm:$0xff]
        %v264 = vld [vmem:[#allocation5 + $0x80] sm:$0xff]
        %v265 = vld [vmem:[#allocation5 + $0x88] sm:$0xff]
        %v266 = vld [vmem:[#allocation5 + $0x90] sm:$0xff]
        %v267 = vld [vmem:[#allocation5 + $0x98] sm:$0xff]
        %v268 = vld [vmem:[#allocation5 + $0xa0] sm:$0xff]
        %v269 = vld [vmem:[#allocation5 + $0xa8] sm:$0xff]
        %v270 = vld [vmem:[#allocation5 + $0xb0] sm:$0xff]
        %v271 = vld [vmem:[#allocation5 + $0xb8] sm:$0xff]
        %v272 = vld [vmem:[#allocation5 + $0xc0] sm:$0xff]
        %v273 = vld [vmem:[#allocation5 + $0xc8] sm:$0xff]
        %v274 = vld [vmem:[#allocation5 + $0xd0] sm:$0xff]
        %v275 = vld [vmem:[#allocation5 + $0xd8] sm:$0xff]
        %v276 = vld [vmem:[#allocation5 + $0xe0] sm:$0xff]
        %v277 = vld [vmem:[#allocation5 + $0xe8] sm:$0xff]
        %v278 = vld [vmem:[#allocation5 + $0xf0] sm:$0xff]
        %v279 = vld [vmem:[#allocation5 + $0xf8] sm:$0xff]
        %v280 = vld [vmem:[#allocation5 + $0x100] sm:$0xff]
        %v281 = vld [vmem:[#allocation5 + $0x108] sm:$0xff]
        %v282 = vld [vmem:[#allocation5 + $0x110] sm:$0xff]
        %v283 = vld [vmem:[#allocation5 + $0x118] sm:$0xff]
        %v284 = vld [vmem:[#allocation5 + $0x120] sm:$0xff]
        %v285 = vld [vmem:[#allocation5 + $0x128] sm:$0xff]
        %v286 = vld [vmem:[#allocation5 + $0x130] sm:$0xff]
        %v287 = vld [vmem:[#allocation5 + $0x138] sm:$0xff]
        %v288 = vld [vmem:[#allocation5 + $0x140] sm:$0xff]
        %v289 = vld [vmem:[#allocation5 + $0x148] sm:$0xff]
        %v290 = vld [vmem:[#allocation5 + $0x150] sm:$0xff]
        %v291 = vld [vmem:[#allocation5 + $0x158] sm:$0xff]
        %v292 = vld [vmem:[#allocation5 + $0x160] sm:$0xff]
        %v293 = vld [vmem:[#allocation5 + $0x168] sm:$0xff]
        %v294 = vld [vmem:[#allocation5 + $0x170] sm:$0xff]
        %v295 = vld [vmem:[#allocation5 + $0x178] sm:$0xff]
        %v296 = vld [vmem:[#allocation5 + $0x180] sm:$0xff]
        %v297 = vld [vmem:[#allocation5 + $0x188] sm:$0xff]
        %v298 = vld [vmem:[#allocation5 + $0x190] sm:$0xff]
        %v299 = vld [vmem:[#allocation5 + $0x198] sm:$0xff]
        %v300 = vld [vmem:[#allocation5 + $0x1a0] sm:$0xff]
        %v301 = vld [vmem:[#allocation5 + $0x1a8] sm:$0xff]
        %v302 = vld [vmem:[#allocation5 + $0x1b0] sm:$0xff]
        %v303 = vld [vmem:[#allocation5 + $0x1b8] sm:$0xff]
        %v304 = vld [vmem:[#allocation5 + $0x1c0] sm:$0xff]
        %v305 = vld [vmem:[#allocation5 + $0x1c8] sm:$0xff]
        %v306 = vld [vmem:[#allocation5 + $0x1d0] sm:$0xff]
        %v307 = vld [vmem:[#allocation5 + $0x1d8] sm:$0xff]
        %v308 = vld [vmem:[#allocation5 + $0x1e0] sm:$0xff]
        %v309 = vld [vmem:[#allocation5 + $0x1e8] sm:$0xff]
        %v310 = vld [vmem:[#allocation5 + $0x1f0] sm:$0xff]
        %v311 = vld [vmem:[#allocation5 + $0x1f8] sm:$0xff]
        %312 = vmatpush.msra.mxu0 %v278
        %313 = vmatpush.msra.mxu0 %v276
        %314 = vmatpush.msra.mxu0 %v274
        %315 = vmatpush.msra.mxu0 %v272
        %316 = vmatpush.msra.mxu0 %v270
        %317 = vmatpush.msra.mxu0 %v268
        %318 = vmatpush.msra.mxu0 %v266
        %319 = vmatpush.msra.mxu0 %v264
        %320 = vmatpush.msra.mxu0 %v262
        %321 = vmatpush.msra.mxu0 %v260
        %322 = vmatpush.msra.mxu0 %v258
        %323 = vmatpush.msra.mxu0 %v256
        %324 = vmatpush.msra.mxu0 %v254
        %325 = vmatpush.msra.mxu0 %v252
        %326 = vmatpush.msra.mxu0 %v250
        %327 = vmatpush.msra.mxu0 %v248
        %328 = vmatmul.f32.gmra.mxu0 %v244
        %v329 = vpop.f32.mrf.mxu0
        %v330 = vadd.f32 0.0, %v329
        %331 = vmatmul.f32.gmra.mxu0 %v246
        %v332 = vpop.f32.mrf.mxu0
        %v333 = vadd.f32 0.0, %v332
        %334 = vdwg.mxu0
        %335 = vmatpush.msra.mxu0 %v310
        %336 = vmatpush.msra.mxu0 %v308
        %337 = vmatpush.msra.mxu0 %v306
        %338 = vmatpush.msra.mxu0 %v304
        %339 = vmatpush.msra.mxu0 %v302
        %340 = vmatpush.msra.mxu0 %v300
        %341 = vmatpush.msra.mxu0 %v298
        %342 = vmatpush.msra.mxu0 %v296
        %343 = vmatpush.msra.mxu0 %v294
        %344 = vmatpush.msra.mxu0 %v292
        %345 = vmatpush.msra.mxu0 %v290
        %346 = vmatpush.msra.mxu0 %v288
        %347 = vmatpush.msra.mxu0 %v286
        %348 = vmatpush.msra.mxu0 %v284
        %349 = vmatpush.msra.mxu0 %v282
        %350 = vmatpush.msra.mxu0 %v280
        %351 = vmatmul.f32.gmra.mxu0 %v245
        %v352 = vpop.f32.mrf.mxu0
        %v353 = vadd.f32 %v330, %v352
        %354 = vmatmul.f32.gmra.mxu0 %v247
        %v355 = vpop.f32.mrf.mxu0
        %v356 = vadd.f32 %v333, %v355
        %357 = vdwg.mxu0
        %358 = vmatpush.msra.mxu0 %v279
        %359 = vmatpush.msra.mxu0 %v277
        %360 = vmatpush.msra.mxu0 %v275
        %361 = vmatpush.msra.mxu0 %v273
        %362 = vmatpush.msra.mxu0 %v271
        %363 = vmatpush.msra.mxu0 %v269
        %364 = vmatpush.msra.mxu0 %v267
        %365 = vmatpush.msra.mxu0 %v265
        %366 = vmatpush.msra.mxu0 %v263
        %367 = vmatpush.msra.mxu0 %v261
        %368 = vmatpush.msra.mxu0 %v259
        %369 = vmatpush.msra.mxu0 %v257
        %370 = vmatpush.msra.mxu0 %v255
        %371 = vmatpush.msra.mxu0 %v253
        %372 = vmatpush.msra.mxu0 %v251
        %373 = vmatpush.msra.mxu0 %v249
        %374 = vmatmul.f32.gmra.mxu0 %v244
        %v375 = vpop.f32.mrf.mxu0
        %v376 = vadd.f32 0.0, %v375
        %377 = vmatmul.f32.gmra.mxu0 %v246
        %v378 = vpop.f32.mrf.mxu0
        %v379 = vadd.f32 0.0, %v378
        %380 = vdwg.mxu0
        %381 = vmatpush.msra.mxu0 %v311
        %382 = vmatpush.msra.mxu0 %v309
        %383 = vmatpush.msra.mxu0 %v307
        %384 = vmatpush.msra.mxu0 %v305
        %385 = vmatpush.msra.mxu0 %v303
        %386 = vmatpush.msra.mxu0 %v301
        %387 = vmatpush.msra.mxu0 %v299
        %388 = vmatpush.msra.mxu0 %v297
        %389 = vmatpush.msra.mxu0 %v295
        %390 = vmatpush.msra.mxu0 %v293
        %391 = vmatpush.msra.mxu0 %v291
        %392 = vmatpush.msra.mxu0 %v289
        %393 = vmatpush.msra.mxu0 %v287
        %394 = vmatpush.msra.mxu0 %v285
        %395 = vmatpush.msra.mxu0 %v283
        %396 = vmatpush.msra.mxu0 %v281
        %397 = vmatmul.f32.gmra.mxu0 %v245
        %v398 = vpop.f32.mrf.mxu0
        %v399 = vadd.f32 %v376, %v398
        %400 = vmatmul.f32.gmra.mxu0 %v247
        %v401 = vpop.f32.mrf.mxu0
        %v402 = vadd.f32 %v379, %v401
        %403 = vdwg.mxu0
        %404 = vst [vmem:[%s227] sm:$0xff] %v353
        %405 = vst [vmem:[%s227 + $0x8] sm:$0xff] %v399
        %406 = vst [vmem:[%s227 + $0x10] sm:$0xff] %v356
        %407 = vst [vmem:[%s227 + $0x18] sm:$0xff] %v402
        %s408 = sand.u32 %s105, 1
        %s409 = scalar_lea.sflag [#allocation4], %s408
        %s410 = sand.u32 %s105, 1
        %s411 = smul.addr %s410, 32
        %s412 = scalar_lea.vmem [#allocation7], %s411
        // Predicated region
        $region37: #{tpu_custom_call.1} parent=27 // pred_check
          %p413 = pneg %p115
        $region38: #{tpu_custom_call.1} parent=27 // pred_check_branch
          %415 = sbr.rel (%p413) target = $region40
        $region39: #{tpu_custom_call.1} parent=27 // pred_region
          %s416 = smul.u32 2, %s26
          %s417 = smul.u32 2, %s25
          %s418 = ssub.s32 3, %s416
          %p419 = scmp.lt.s32.totalorder %s418, 2
          %s420 = scalar_select %p419, %s418, 2
          %s421 = smul.u32 8, %s420
          %s422 = smul.u32 %s421, 2
          %s423 = ssub.s32 32, %s422
          %s424 = sshll.u32 %s423, 4
          %425 = vsyncadd %s409, %s424
          %p426 = scmp.ne.s32.totalorder 0, %s422
          %s427 = smul.addr %s416, 2
          %s428 = sadd.s32 %s417, %s427
          %s429 = smul.addr %s428, 8
          %s430 = scalar_lea.hbm %s2, %s429
          %s431 = smul.u32 16, %s420
          %s432 = sshll.u32 %s412, 4
          %s433 = int_to_ptr.vmem [resolvable:$true] %s432
          %s434 = sshll.u32 %s430, 4
          %s435 = int_to_ptr.hbm [resolvable:$true] %s434
          %s436 = sshll.u32 %s431, 4
          %440 = dma.vmem_to_hbm [thread:$0]  (%p426), %s433, %s436, %s435, %s409, 256, 256, 16
        $region40: #{tpu_custom_call.1} parent=27 // pred_fallthru
          _
      $region28: #{tpu_custom_call.1} parent=5 // pred_fallthru
        _
      %p441 = scmp.le.s32.totalorder 2, %s15
      // Predicated region
      $region41: #{tpu_custom_call.1} parent=5 // pred_check
        %p442 = pneg %p441
      $region42: #{tpu_custom_call.1} parent=5 // pred_check_branch
        %444 = sbr.rel (%p442) target = $region44
      $region43: #{tpu_custom_call.1} parent=5 // pred_region
        %s445 = ssub.s32 %s15, 2
        // Predicated region
        $region45: #{tpu_custom_call.1} parent=43 // pred_check
          %p446 = pneg %p121
        $region46: #{tpu_custom_call.1} parent=43 // pred_check_branch
          %448 = sbr.rel (%p446) target = $region48
        $region47: #{tpu_custom_call.1} parent=43 // pred_region
          %s449 = sand.u32 %s106, 1
          %s450 = scalar_lea.sflag [#allocation4], %s449
          %s451 = sand.u32 %s106, 1
          %s452 = smul.addr %s451, 32
          %s453 = scalar_lea.vmem [#allocation7], %s452
          %455 = dma.done %s450, 512
        $region48: #{tpu_custom_call.1} parent=43 // pred_fallthru
          _
      $region44: #{tpu_custom_call.1} parent=5 // pred_fallthru
        _
    $region6: #{tpu_custom_call.1} parent=1 // loop_footer
      %s19 = sadd.s32 1, %s15
    $region7: #{tpu_custom_call.1} parent=1 // loop_footer_branch
      %14 = sbr.rel target = $region3
    $region8: #{tpu_custom_call.1} parent=1 // loop_exit
      _
    %456 = vsyncpa [#allocation3], 1
    %s457 = scalar_lea.sflag [#allocation3], 1
    %458 = vsyncpa %s457, 1
    %459 = vsyncpa [#allocation6], 1
    %460 = vsyncpa [#allocation4], 1
    %s461 = scalar_lea.sflag [#allocation4], 1
    %462 = vsyncpa %s461, 1

</llo_original>
